<compile_context>
chip_gen: v6e
topology: v6e:2x2x1
jax: 0.10.0
libtpu: 0.0.40
codegen_flags: <defaults>
</compile_context>

<pallas_src>
import functools

import jax
import jax.numpy as jnp
from jax.experimental import pallas as pl
from jax.experimental.pallas import tpu as pltpu

_LANES = 128
_SUB = 8                     # f32 sublanes per vreg
_GROUP = _SUB * _LANES       # 1024 voxels = one f32 vreg
_SMOOTH = 1e-5


def _round_up(x, m):
    return (x + m - 1) // m * m


def _vmem_budgets():
    """(per-step working-set budget, vmem_limit_bytes) gated on physical VMEM."""
    try:
        phys = int(pltpu.get_tpu_info().vmem_capacity_bytes)
    except Exception:
        phys = 64 * 1024 * 1024          # conservative fallback (v7x-sized)
    if phys >= 96 * 1024 * 1024:         # v5e / v6e: 128 MiB physical
        return 48 * 1024 * 1024, 64 * 1024 * 1024
    return 20 * 1024 * 1024, 40 * 1024 * 1024   # v7x: 64 MiB physical


def _bdou_partial_kernel(pred_ref, tgt_ref, z_ref, y_ref, i_ref, *,
                         rt, grp, kg, s_total, num_ch, needs_mask):
    """Accumulate per-class partial sums of (probs, one_hot, probs*one_hot).

    pred_ref: (C, rt, 128) logits (any float dtype, cast to f32 in registers).
    tgt_ref : (rt, 128) int32 labels; padded voxels carry -1.
    z/y/i_ref: (C, 8, 128) f32 resident accumulators (lane/sublane partials).
    """
    k = pl.program_id(2)

    @pl.when(k == 0)
    def _():
        z_ref[...] = jnp.zeros_like(z_ref)
        y_ref[...] = jnp.zeros_like(y_ref)
        i_ref[...] = jnp.zeros_like(i_ref)

    n_groups = rt // grp

    def _fold8(x):
        # (grp, 128) -> (8, 128): add sublane-tile-aligned 8-row chunks (VPU only).
        acc = x[0:_SUB, :]
        for j in range(1, grp // _SUB):
            acc = acc + x[j * _SUB:(j + 1) * _SUB, :]
        return acc

    def accumulate(mask_pad):
        zero = jnp.zeros((_SUB, _LANES), jnp.float32)
        z_acc = [zero] * num_ch
        y_acc = [zero] * num_ch
        i_acc = [zero] * num_ch
        for gi in range(n_groups):
            r0 = gi * grp
            lab = tgt_ref[r0:r0 + grp, :]                          # (grp,128) i32
            logit = [pred_ref[c, r0:r0 + grp, :].astype(jnp.float32)
                     for c in range(num_ch)]
            # softmax across channels: C-1 maxes, C exps, C-1 adds, 1 reciprocal.
            m = logit[0]
            for c in range(1, num_ch):
                m = jnp.maximum(m, logit[c])
            e = [jnp.exp(logit[c] - m) for c in range(num_ch)]
            denom = e[0]
            for c in range(1, num_ch):
                denom = denom + e[c]
            inv = pl.reciprocal(denom)             # exact (keeps 1e-5 tolerance)
            valid = (lab >= 0) if mask_pad else None
            for c in range(num_ch):
                p = e[c] * inv                     # softmax prob of channel c
                onehot = lab == c                  # one_hot(target, C)[..., c]
                pz = jnp.where(valid, p, 0.0) if mask_pad else p
                z_acc[c] = z_acc[c] + _fold8(pz)
                y_acc[c] = y_acc[c] + _fold8(onehot.astype(jnp.float32))
                i_acc[c] = i_acc[c] + _fold8(jnp.where(onehot, p, 0.0))
        for c in range(num_ch):
            z_ref[c] += z_acc[c]
            y_ref[c] += y_acc[c]
            i_ref[c] += i_acc[c]

    if needs_mask:
        # Only tiles whose coverage extends past S carry padded voxels; gate the
        # masked path at runtime.  Both branches accumulate (correctness!).
        row0 = (pl.program_id(1) * kg + k) * rt
        has_pad = (row0 + rt) * _LANES > s_total

        @pl.when(jnp.logical_not(has_pad))
        def _():
            accumulate(False)

        @pl.when(has_pad)
        def _():
            accumulate(True)
    else:
        accumulate(False)


def boundary_dou_loss(pred, target, include_background=True,
                      tile_v=65536, num_splits=1):
    """pred: [N, C, *spatial] logits (f32 or bf16); target: [N, 1, *spatial] int labels.

    num_splits: extra 'parallel' split of the voxel reduction.  Keep 1 on
    single-TensorCore chips (v5e/v6e) and whenever N >= 2; set 2 on v7x when
    N == 1 so the second TensorCore gets half of the reduction.
    """
    N, C = int(pred.shape[0]), int(pred.shape[1])
    S = 1
    for s in pred.shape[2:]:
        S *= int(s)

    work_budget, vmem_limit = _vmem_budgets()
    pred_bytes = jnp.dtype(pred.dtype).itemsize
    # Rows per in-kernel load group: one packed vreg worth of rows for the
    # logits dtype (8 for f32, 16 for bf16) -> no sub-tile packed loads.
    grp = _SUB * max(1, 4 // pred_bytes)

    rows_needed = -(-S // _LANES)
    rt_req = max(grp, _round_up(int(tile_v), grp * _LANES) // _LANES)
    rt = min(rt_req, _round_up(rows_needed, grp))
    # Shrink the tile until the per-step working set (double-buffered pred +
    # label blocks; temporaries stay in registers) fits the scoped-VMEM budget.
    while rt > grp and 2 * rt * _LANES * (C * pred_bytes + 4) > work_budget:
        rt = max(grp, (rt // 2) // grp * grp)
    tv = rt * _LANES

    K = -(-rows_needed // rt)                 # voxel tiles needed to cover S
    G = max(1, min(int(num_splits), K))       # parallel split of the reduction
    Kg = -(-K // G)
    rows_pad = G * Kg * rt
    S_pad = rows_pad * _LANES
    needs_mask = S_pad != S
    # Exact tiling: every voxel covered exactly once; padded voxels (label -1,
    # zero logits) are excluded in-kernel iff needs_mask is compiled in.
    assert rows_pad % rt == 0 and rows_pad >= rows_needed
    assert needs_mask or S_pad == S

    pred_flat = pred.reshape(N, C, S)                       # native dtype, no copy
    labels_flat = target.reshape(N, S).astype(jnp.int32)
    if S_pad != S:
        pad = S_pad - S
        pred_flat = jnp.pad(pred_flat, ((0, 0), (0, 0), (0, pad)))
        labels_flat = jnp.pad(labels_flat, ((0, 0), (0, pad)), constant_values=-1)
    pred4 = pred_flat.reshape(N, C, rows_pad, _LANES)       # dense per-channel tiles
    labels3 = labels_flat.reshape(N, rows_pad, _LANES)

    kernel = functools.partial(_bdou_partial_kernel, rt=rt, grp=grp, kg=Kg,
                               s_total=S, num_ch=C, needs_mask=needs_mask)
    part_shape = jax.ShapeDtypeStruct((N, G, C, _SUB, _LANES), jnp.float32)
    out_spec = pl.BlockSpec((None, None, C, _SUB, _LANES),
                            lambda n, g, k: (n, g, 0, 0, 0))

    z_p, y_p, i_p = pl.pallas_call(
        kernel,
        out_shape=(part_shape, part_shape, part_shape),
        grid_spec=pltpu.PrefetchScalarGridSpec(
            num_scalar_prefetch=0,
            grid=(N, G, Kg),
            in_specs=[
                pl.BlockSpec((None, C, rt, _LANES),
                             lambda n, g, k: (n, 0, g * Kg + k, 0)),
                pl.BlockSpec((None, rt, _LANES),
                             lambda n, g, k: (n, g * Kg + k, 0)),
            ],
            out_specs=(out_spec, out_spec, out_spec),
        ),
        compiler_params=pltpu.CompilerParams(
            dimension_semantics=("parallel", "parallel", "arbitrary"),
            vmem_limit_bytes=vmem_limit),
    )(pred4, labels3)

    # Tiny O(C) epilogue in plain JAX: combine per-(batch, split, sublane, lane)
    # partials and apply the BoundaryDoU formula.
    z = jnp.sum(z_p, axis=(0, 1, 3, 4))
    y = jnp.sum(y_p, axis=(0, 1, 3, 4))
    inter = jnp.sum(i_p, axis=(0, 1, 3, 4))
    s_cnt = y                                 # one-hot target: count_nonzero == sum
    # C_count == 0: the reference's conv output is overwritten with zeros before use.
    alpha = 1.0 - (0.0 + _SMOOTH) / (s_cnt + _SMOOTH)
    alpha = jnp.minimum(2.0 * alpha - 1.0, 0.8)
    loss_c = (z + y - 2.0 * inter + _SMOOTH) / (z + y - (1.0 + alpha) * inter + _SMOOTH)
    # include_background=False with a single channel is ignored (reference warns).
    c0 = 0 if (include_background or C == 1) else 1
    return jnp.mean(loss_c[c0:])


def _reference(pred, target, include_background):
    """Pure-JAX reference mirroring the PyTorch module semantics (f32 math)."""
    C = pred.shape[1]
    probs = jax.nn.softmax(pred.astype(jnp.float32), axis=1)
    oh = jax.nn.one_hot(target[:, 0], C, axis=1, dtype=jnp.float32)
    c0 = 0 if (include_background or C == 1) else 1
    smooth = 1e-5
    total = 0.0
    for c in range(c0, C):
        p = probs[:, c]
        t = oh[:, c]
        s_cnt = jnp.sum((t != 0).astype(jnp.float32))
        alpha = jnp.minimum(2.0 * (1.0 - (0.0 + smooth) / (s_cnt + smooth)) - 1.0, 0.8)
        inter = jnp.sum(p * t)
        ys = jnp.sum(t)
        zs = jnp.sum(p)
        total = total + (zs + ys - 2.0 * inter + smooth) / (zs + ys - (1.0 + alpha) * inter + smooth)
    return total / (C - c0)


if __name__ == "__main__":
    key = jax.random.PRNGKey(0)
    k1, k2 = jax.random.split(key)
    N, C, D, H, W = 2, 4, 8, 16, 16
    pred = jax.random.normal(k1, (N, C, D, H, W), dtype=jnp.float32)
    target = jax.random.randint(k2, (N, 1, D, H, W), 0, C, dtype=jnp.int32)

    # Default large-tile path (single tile per batch element here).
    for inc_bg in (True, False):
        loss = jax.block_until_ready(boundary_dou_loss(pred, target, include_background=inc_bg))
        ref = _reference(pred, target, inc_bg)
        assert jnp.allclose(loss, ref, rtol=1e-5, atol=1e-5), (inc_bg, loss, ref)

    # Multi-tile reduction (K=2), and the same with a 2-way split on the G axis.
    loss = jax.block_until_ready(boundary_dou_loss(pred, target, True, tile_v=1024))
    assert jnp.allclose(loss, _reference(pred, target, True), rtol=1e-5, atol=1e-5)
    loss = jax.block_until_ready(boundary_dou_loss(pred, target, True, tile_v=1024, num_splits=2))
    assert jnp.allclose(loss, _reference(pred, target, True), rtol=1e-5, atol=1e-5)

    # Odd spatial extent (S not a multiple of 128) -> padded tail + masked pl.when branch.
    k3, k4 = jax.random.split(k2)
    pred2 = jax.random.normal(k3, (1, 3, 5, 7, 9), dtype=jnp.float32)
    target2 = jax.random.randint(k4, (1, 1, 5, 7, 9), 0, 3, dtype=jnp.int32)
    loss2 = jax.block_until_ready(boundary_dou_loss(pred2, target2, include_background=True))
    assert jnp.allclose(loss2, _reference(pred2, target2, True), rtol=1e-5, atol=1e-5)

    # Multi-tile + padded tail: first tile takes the unmasked branch, last the masked one.
    k5, k6 = jax.random.split(k4)
    pred3 = jax.random.normal(k5, (1, 4, 6, 17, 13), dtype=jnp.float32)
    target3 = jax.random.randint(k6, (1, 1, 6, 17, 13), 0, 4, dtype=jnp.int32)
    loss3 = jax.block_until_ready(boundary_dou_loss(pred3, target3, True, tile_v=1024))
    assert jnp.allclose(loss3, _reference(pred3, target3, True), rtol=1e-5, atol=1e-5)

    # bf16 logits pass straight through (16-row packed load groups, f32 math in-kernel).
    loss4 = jax.block_until_ready(
        boundary_dou_loss(pred.astype(jnp.bfloat16), target, include_background=True))
    ref4 = _reference(pred.astype(jnp.bfloat16), target, True)
    assert jnp.allclose(loss4, ref4, rtol=1e-4, atol=1e-4), (loss4, ref4)

    print("KERNEL_OK")
</pallas_src>

<mosaic_0001>
module attributes {stable_mosaic.version = 11 : i64} {
  func.func @_bdou_partial_kernel(%arg0: i32, %arg1: i32, %arg2: i32, %arg3: memref<1x4x16x128xf32, #tpu.memory_space<vmem>>, %arg4: memref<1x16x128xi32, #tpu.memory_space<vmem>>, %arg5: memref<1x1x4x8x128xf32, #tpu.memory_space<vmem>>, %arg6: memref<1x1x4x8x128xf32, #tpu.memory_space<vmem>>, %arg7: memref<1x1x4x8x128xf32, #tpu.memory_space<vmem>>) attributes {dimension_semantics = [#tpu.dimension_semantics<parallel>, #tpu.dimension_semantics<parallel>, #tpu.dimension_semantics<arbitrary>], iteration_bounds = array<i64: 2, 1, 1>, scalar_prefetch = 0 : i64, scratch_operands = 0 : i64, tpu.core_type = #tpu.core_type<tc>, window_params = [{transform_indices = @transform_0, window_bounds = array<i64: 1, 4, 16, 128>}, {transform_indices = @transform_1, window_bounds = array<i64: 1, 16, 128>}, {transform_indices = @transform_2, window_bounds = array<i64: 1, 1, 4, 8, 128>}, {transform_indices = @transform_3, window_bounds = array<i64: 1, 1, 4, 8, 128>}, {transform_indices = @transform_4, window_bounds = array<i64: 1, 1, 4, 8, 128>}]} {
    %c0_i32 = arith.constant 0 : i32
    %0 = arith.cmpi eq, %arg2, %c0_i32 : i32
    %1 = arith.extui %0 : i1 to i32
    %c0_i32_0 = arith.constant 0 : i32
    %2 = arith.cmpi ne, %1, %c0_i32_0 : i32
    scf.if %2 {
      %cst_167 = arith.constant 0.000000e+00 : f32
      %206 = vector.broadcast %cst_167 : f32 to vector<4x8x128xf32>
      %c0_168 = arith.constant 0 : index
      %c0_169 = arith.constant 0 : index
      %c0_170 = arith.constant 0 : index
      %c0_171 = arith.constant 0 : index
      %c0_172 = arith.constant 0 : index
      %207 = vector.load %arg5[%c0_168, %c0_169, %c0_170, %c0_171, %c0_172] : memref<1x1x4x8x128xf32, #tpu.memory_space<vmem>>, vector<1x1x4x8x128xf32>
      %208 = vector.shape_cast %207 : vector<1x1x4x8x128xf32> to vector<4x8x128xf32>
      %209 = vector.shape_cast %206 : vector<4x8x128xf32> to vector<1x1x4x8x128xf32>
      tpu.vector_store %arg5[%c0_168, %c0_169, %c0_170, %c0_171, %c0_172], %209 {strides = array<i32>} : memref<1x1x4x8x128xf32, #tpu.memory_space<vmem>>, vector<1x1x4x8x128xf32>,
      %cst_173 = arith.constant 0.000000e+00 : f32
      %210 = vector.broadcast %cst_173 : f32 to vector<4x8x128xf32>
      %c0_174 = arith.constant 0 : index
      %c0_175 = arith.constant 0 : index
      %c0_176 = arith.constant 0 : index
      %c0_177 = arith.constant 0 : index
      %c0_178 = arith.constant 0 : index
      %211 = vector.load %arg6[%c0_174, %c0_175, %c0_176, %c0_177, %c0_178] : memref<1x1x4x8x128xf32, #tpu.memory_space<vmem>>, vector<1x1x4x8x128xf32>
      %212 = vector.shape_cast %211 : vector<1x1x4x8x128xf32> to vector<4x8x128xf32>
      %213 = vector.shape_cast %210 : vector<4x8x128xf32> to vector<1x1x4x8x128xf32>
      tpu.vector_store %arg6[%c0_174, %c0_175, %c0_176, %c0_177, %c0_178], %213 {strides = array<i32>} : memref<1x1x4x8x128xf32, #tpu.memory_space<vmem>>, vector<1x1x4x8x128xf32>,
      %cst_179 = arith.constant 0.000000e+00 : f32
      %214 = vector.broadcast %cst_179 : f32 to vector<4x8x128xf32>
      %c0_180 = arith.constant 0 : index
      %c0_181 = arith.constant 0 : index
      %c0_182 = arith.constant 0 : index
      %c0_183 = arith.constant 0 : index
      %c0_184 = arith.constant 0 : index
      %215 = vector.load %arg7[%c0_180, %c0_181, %c0_182, %c0_183, %c0_184] : memref<1x1x4x8x128xf32, #tpu.memory_space<vmem>>, vector<1x1x4x8x128xf32>
      %216 = vector.shape_cast %215 : vector<1x1x4x8x128xf32> to vector<4x8x128xf32>
      %217 = vector.shape_cast %214 : vector<4x8x128xf32> to vector<1x1x4x8x128xf32>
      tpu.vector_store %arg7[%c0_180, %c0_181, %c0_182, %c0_183, %c0_184], %217 {strides = array<i32>} : memref<1x1x4x8x128xf32, #tpu.memory_space<vmem>>, vector<1x1x4x8x128xf32>,
    } else {
    }
    %cst = arith.constant 0.000000e+00 : f32
    %3 = vector.broadcast %cst : f32 to vector<8x128xf32>
    %c0 = arith.constant 0 : index
    %c0_1 = arith.constant 0 : index
    %c0_2 = arith.constant 0 : index
    %4 = vector.load %arg4[%c0, %c0_1, %c0_2] : memref<1x16x128xi32, #tpu.memory_space<vmem>>, vector<1x8x128xi32>
    %5 = vector.shape_cast %4 : vector<1x8x128xi32> to vector<8x128xi32>
    %c0_3 = arith.constant 0 : index
    %c0_4 = arith.constant 0 : index
    %c0_5 = arith.constant 0 : index
    %c0_6 = arith.constant 0 : index
    %6 = vector.load %arg3[%c0_3, %c0_4, %c0_5, %c0_6] : memref<1x4x16x128xf32, #tpu.memory_space<vmem>>, vector<1x1x8x128xf32>
    %7 = vector.shape_cast %6 : vector<1x1x8x128xf32> to vector<8x128xf32>
    %c0_7 = arith.constant 0 : index
    %c1 = arith.constant 1 : index
    %c0_8 = arith.constant 0 : index
    %c0_9 = arith.constant 0 : index
    %8 = vector.load %arg3[%c0_7, %c1, %c0_8, %c0_9] : memref<1x4x16x128xf32, #tpu.memory_space<vmem>>, vector<1x1x8x128xf32>
    %9 = vector.shape_cast %8 : vector<1x1x8x128xf32> to vector<8x128xf32>
    %c0_10 = arith.constant 0 : index
    %c2 = arith.constant 2 : index
    %c0_11 = arith.constant 0 : index
    %c0_12 = arith.constant 0 : index
    %10 = vector.load %arg3[%c0_10, %c2, %c0_11, %c0_12] : memref<1x4x16x128xf32, #tpu.memory_space<vmem>>, vector<1x1x8x128xf32>
    %11 = vector.shape_cast %10 : vector<1x1x8x128xf32> to vector<8x128xf32>
    %c0_13 = arith.constant 0 : index
    %c3 = arith.constant 3 : index
    %c0_14 = arith.constant 0 : index
    %c0_15 = arith.constant 0 : index
    %12 = vector.load %arg3[%c0_13, %c3, %c0_14, %c0_15] : memref<1x4x16x128xf32, #tpu.memory_space<vmem>>, vector<1x1x8x128xf32>
    %13 = vector.shape_cast %12 : vector<1x1x8x128xf32> to vector<8x128xf32>
    %14 = arith.maximumf %7, %9 : vector<8x128xf32>
    %15 = arith.maximumf %14, %11 : vector<8x128xf32>
    %16 = arith.maximumf %15, %13 : vector<8x128xf32>
    %17 = arith.subf %7, %16 : vector<8x128xf32>
    %18 = math.exp %17 : vector<8x128xf32>
    %19 = arith.subf %9, %16 : vector<8x128xf32>
    %20 = math.exp %19 : vector<8x128xf32>
    %21 = arith.subf %11, %16 : vector<8x128xf32>
    %22 = math.exp %21 : vector<8x128xf32>
    %23 = arith.subf %13, %16 : vector<8x128xf32>
    %24 = math.exp %23 : vector<8x128xf32>
    %25 = arith.addf %18, %20 : vector<8x128xf32>
    %26 = arith.addf %25, %22 : vector<8x128xf32>
    %27 = arith.addf %26, %24 : vector<8x128xf32>
    %28 = tpu.reciprocal %27 : vector<8x128xf32> -> vector<8x128xf32>
    %29 = arith.mulf %18, %28 : vector<8x128xf32>
    %c0_i32_16 = arith.constant 0 : i32
    %30 = vector.broadcast %c0_i32_16 : i32 to vector<8x128xi32>
    %31 = arith.cmpi eq, %5, %30 : vector<8x128xi32>
    %32 = arith.addf %3, %29 : vector<8x128xf32>
    %33 = arith.extui %31 : vector<8x128xi1> to vector<8x128xi32>
    %34 = arith.sitofp %33 : vector<8x128xi32> to vector<8x128xf32>
    %35 = arith.addf %3, %34 : vector<8x128xf32>
    %cst_17 = arith.constant 0.000000e+00 : f32
    %36 = vector.broadcast %cst_17 : f32 to vector<8x128xf32>
    %37 = arith.select %31, %29, %36 : vector<8x128xi1>, vector<8x128xf32>
    %38 = arith.addf %3, %37 : vector<8x128xf32>
    %39 = arith.mulf %20, %28 : vector<8x128xf32>
    %c1_i32 = arith.constant 1 : i32
    %40 = vector.broadcast %c1_i32 : i32 to vector<8x128xi32>
    %41 = arith.cmpi eq, %5, %40 : vector<8x128xi32>
    %42 = arith.addf %3, %39 : vector<8x128xf32>
    %43 = arith.extui %41 : vector<8x128xi1> to vector<8x128xi32>
    %44 = arith.sitofp %43 : vector<8x128xi32> to vector<8x128xf32>
    %45 = arith.addf %3, %44 : vector<8x128xf32>
    %cst_18 = arith.constant 0.000000e+00 : f32
    %46 = vector.broadcast %cst_18 : f32 to vector<8x128xf32>
    %47 = arith.select %41, %39, %46 : vector<8x128xi1>, vector<8x128xf32>
    %48 = arith.addf %3, %47 : vector<8x128xf32>
    %49 = arith.mulf %22, %28 : vector<8x128xf32>
    %c2_i32 = arith.constant 2 : i32
    %50 = vector.broadcast %c2_i32 : i32 to vector<8x128xi32>
    %51 = arith.cmpi eq, %5, %50 : vector<8x128xi32>
    %52 = arith.addf %3, %49 : vector<8x128xf32>
    %53 = arith.extui %51 : vector<8x128xi1> to vector<8x128xi32>
    %54 = arith.sitofp %53 : vector<8x128xi32> to vector<8x128xf32>
    %55 = arith.addf %3, %54 : vector<8x128xf32>
    %cst_19 = arith.constant 0.000000e+00 : f32
    %56 = vector.broadcast %cst_19 : f32 to vector<8x128xf32>
    %57 = arith.select %51, %49, %56 : vector<8x128xi1>, vector<8x128xf32>
    %58 = arith.addf %3, %57 : vector<8x128xf32>
    %59 = arith.mulf %24, %28 : vector<8x128xf32>
    %c3_i32 = arith.constant 3 : i32
    %60 = vector.broadcast %c3_i32 : i32 to vector<8x128xi32>
    %61 = arith.cmpi eq, %5, %60 : vector<8x128xi32>
    %62 = arith.addf %3, %59 : vector<8x128xf32>
    %63 = arith.extui %61 : vector<8x128xi1> to vector<8x128xi32>
    %64 = arith.sitofp %63 : vector<8x128xi32> to vector<8x128xf32>
    %65 = arith.addf %3, %64 : vector<8x128xf32>
    %cst_20 = arith.constant 0.000000e+00 : f32
    %66 = vector.broadcast %cst_20 : f32 to vector<8x128xf32>
    %67 = arith.select %61, %59, %66 : vector<8x128xi1>, vector<8x128xf32>
    %68 = arith.addf %3, %67 : vector<8x128xf32>
    %c0_21 = arith.constant 0 : index
    %c8 = arith.constant 8 : index
    %c0_22 = arith.constant 0 : index
    %69 = vector.load %arg4[%c0_21, %c8, %c0_22] : memref<1x16x128xi32, #tpu.memory_space<vmem>>, vector<1x8x128xi32>
    %70 = vector.shape_cast %69 : vector<1x8x128xi32> to vector<8x128xi32>
    %c0_23 = arith.constant 0 : index
    %c0_24 = arith.constant 0 : index
    %c8_25 = arith.constant 8 : index
    %c0_26 = arith.constant 0 : index
    %71 = vector.load %arg3[%c0_23, %c0_24, %c8_25, %c0_26] : memref<1x4x16x128xf32, #tpu.memory_space<vmem>>, vector<1x1x8x128xf32>
    %72 = vector.shape_cast %71 : vector<1x1x8x128xf32> to vector<8x128xf32>
    %c0_27 = arith.constant 0 : index
    %c1_28 = arith.constant 1 : index
    %c8_29 = arith.constant 8 : index
    %c0_30 = arith.constant 0 : index
    %73 = vector.load %arg3[%c0_27, %c1_28, %c8_29, %c0_30] : memref<1x4x16x128xf32, #tpu.memory_space<vmem>>, vector<1x1x8x128xf32>
    %74 = vector.shape_cast %73 : vector<1x1x8x128xf32> to vector<8x128xf32>
    %c0_31 = arith.constant 0 : index
    %c2_32 = arith.constant 2 : index
    %c8_33 = arith.constant 8 : index
    %c0_34 = arith.constant 0 : index
    %75 = vector.load %arg3[%c0_31, %c2_32, %c8_33, %c0_34] : memref<1x4x16x128xf32, #tpu.memory_space<vmem>>, vector<1x1x8x128xf32>
    %76 = vector.shape_cast %75 : vector<1x1x8x128xf32> to vector<8x128xf32>
    %c0_35 = arith.constant 0 : index
    %c3_36 = arith.constant 3 : index
    %c8_37 = arith.constant 8 : index
    %c0_38 = arith.constant 0 : index
    %77 = vector.load %arg3[%c0_35, %c3_36, %c8_37, %c0_38] : memref<1x4x16x128xf32, #tpu.memory_space<vmem>>, vector<1x1x8x128xf32>
    %78 = vector.shape_cast %77 : vector<1x1x8x128xf32> to vector<8x128xf32>
    %79 = arith.maximumf %72, %74 : vector<8x128xf32>
    %80 = arith.maximumf %79, %76 : vector<8x128xf32>
    %81 = arith.maximumf %80, %78 : vector<8x128xf32>
    %82 = arith.subf %72, %81 : vector<8x128xf32>
    %83 = math.exp %82 : vector<8x128xf32>
    %84 = arith.subf %74, %81 : vector<8x128xf32>
    %85 = math.exp %84 : vector<8x128xf32>
    %86 = arith.subf %76, %81 : vector<8x128xf32>
    %87 = math.exp %86 : vector<8x128xf32>
    %88 = arith.subf %78, %81 : vector<8x128xf32>
    %89 = math.exp %88 : vector<8x128xf32>
    %90 = arith.addf %83, %85 : vector<8x128xf32>
    %91 = arith.addf %90, %87 : vector<8x128xf32>
    %92 = arith.addf %91, %89 : vector<8x128xf32>
    %93 = tpu.reciprocal %92 : vector<8x128xf32> -> vector<8x128xf32>
    %94 = arith.mulf %83, %93 : vector<8x128xf32>
    %c0_i32_39 = arith.constant 0 : i32
    %95 = vector.broadcast %c0_i32_39 : i32 to vector<8x128xi32>
    %96 = arith.cmpi eq, %70, %95 : vector<8x128xi32>
    %97 = arith.addf %32, %94 : vector<8x128xf32>
    %98 = arith.extui %96 : vector<8x128xi1> to vector<8x128xi32>
    %99 = arith.sitofp %98 : vector<8x128xi32> to vector<8x128xf32>
    %100 = arith.addf %35, %99 : vector<8x128xf32>
    %cst_40 = arith.constant 0.000000e+00 : f32
    %101 = vector.broadcast %cst_40 : f32 to vector<8x128xf32>
    %102 = arith.select %96, %94, %101 : vector<8x128xi1>, vector<8x128xf32>
    %103 = arith.addf %38, %102 : vector<8x128xf32>
    %104 = arith.mulf %85, %93 : vector<8x128xf32>
    %c1_i32_41 = arith.constant 1 : i32
    %105 = vector.broadcast %c1_i32_41 : i32 to vector<8x128xi32>
    %106 = arith.cmpi eq, %70, %105 : vector<8x128xi32>
    %107 = arith.addf %42, %104 : vector<8x128xf32>
    %108 = arith.extui %106 : vector<8x128xi1> to vector<8x128xi32>
    %109 = arith.sitofp %108 : vector<8x128xi32> to vector<8x128xf32>
    %110 = arith.addf %45, %109 : vector<8x128xf32>
    %cst_42 = arith.constant 0.000000e+00 : f32
    %111 = vector.broadcast %cst_42 : f32 to vector<8x128xf32>
    %112 = arith.select %106, %104, %111 : vector<8x128xi1>, vector<8x128xf32>
    %113 = arith.addf %48, %112 : vector<8x128xf32>
    %114 = arith.mulf %87, %93 : vector<8x128xf32>
    %c2_i32_43 = arith.constant 2 : i32
    %115 = vector.broadcast %c2_i32_43 : i32 to vector<8x128xi32>
    %116 = arith.cmpi eq, %70, %115 : vector<8x128xi32>
    %117 = arith.addf %52, %114 : vector<8x128xf32>
    %118 = arith.extui %116 : vector<8x128xi1> to vector<8x128xi32>
    %119 = arith.sitofp %118 : vector<8x128xi32> to vector<8x128xf32>
    %120 = arith.addf %55, %119 : vector<8x128xf32>
    %cst_44 = arith.constant 0.000000e+00 : f32
    %121 = vector.broadcast %cst_44 : f32 to vector<8x128xf32>
    %122 = arith.select %116, %114, %121 : vector<8x128xi1>, vector<8x128xf32>
    %123 = arith.addf %58, %122 : vector<8x128xf32>
    %124 = arith.mulf %89, %93 : vector<8x128xf32>
    %c3_i32_45 = arith.constant 3 : i32
    %125 = vector.broadcast %c3_i32_45 : i32 to vector<8x128xi32>
    %126 = arith.cmpi eq, %70, %125 : vector<8x128xi32>
    %127 = arith.addf %62, %124 : vector<8x128xf32>
    %128 = arith.extui %126 : vector<8x128xi1> to vector<8x128xi32>
    %129 = arith.sitofp %128 : vector<8x128xi32> to vector<8x128xf32>
    %130 = arith.addf %65, %129 : vector<8x128xf32>
    %cst_46 = arith.constant 0.000000e+00 : f32
    %131 = vector.broadcast %cst_46 : f32 to vector<8x128xf32>
    %132 = arith.select %126, %124, %131 : vector<8x128xi1>, vector<8x128xf32>
    %133 = arith.addf %68, %132 : vector<8x128xf32>
    %c0_47 = arith.constant 0 : index
    %c0_48 = arith.constant 0 : index
    %c0_49 = arith.constant 0 : index
    %c0_50 = arith.constant 0 : index
    %c0_51 = arith.constant 0 : index
    %134 = vector.load %arg5[%c0_47, %c0_48, %c0_49, %c0_50, %c0_51] : memref<1x1x4x8x128xf32, #tpu.memory_space<vmem>>, vector<1x1x1x8x128xf32>
    %135 = vector.shape_cast %134 : vector<1x1x1x8x128xf32> to vector<8x128xf32>
    %136 = arith.addf %135, %97 : vector<8x128xf32>
    %c0_52 = arith.constant 0 : index
    %c0_53 = arith.constant 0 : index
    %c0_54 = arith.constant 0 : index
    %c0_55 = arith.constant 0 : index
    %c0_56 = arith.constant 0 : index
    %137 = vector.load %arg5[%c0_52, %c0_53, %c0_54, %c0_55, %c0_56] : memref<1x1x4x8x128xf32, #tpu.memory_space<vmem>>, vector<1x1x1x8x128xf32>
    %138 = vector.shape_cast %137 : vector<1x1x1x8x128xf32> to vector<8x128xf32>
    %139 = vector.shape_cast %136 : vector<8x128xf32> to vector<1x1x1x8x128xf32>
    tpu.vector_store %arg5[%c0_52, %c0_53, %c0_54, %c0_55, %c0_56], %139 {strides = array<i32>} : memref<1x1x4x8x128xf32, #tpu.memory_space<vmem>>, vector<1x1x1x8x128xf32>,
    %c0_57 = arith.constant 0 : index
    %c0_58 = arith.constant 0 : index
    %c0_59 = arith.constant 0 : index
    %c0_60 = arith.constant 0 : index
    %c0_61 = arith.constant 0 : index
    %140 = vector.load %arg6[%c0_57, %c0_58, %c0_59, %c0_60, %c0_61] : memref<1x1x4x8x128xf32, #tpu.memory_space<vmem>>, vector<1x1x1x8x128xf32>
    %141 = vector.shape_cast %140 : vector<1x1x1x8x128xf32> to vector<8x128xf32>
    %142 = arith.addf %141, %100 : vector<8x128xf32>
    %c0_62 = arith.constant 0 : index
    %c0_63 = arith.constant 0 : index
    %c0_64 = arith.constant 0 : index
    %c0_65 = arith.constant 0 : index
    %c0_66 = arith.constant 0 : index
    %143 = vector.load %arg6[%c0_62, %c0_63, %c0_64, %c0_65, %c0_66] : memref<1x1x4x8x128xf32, #tpu.memory_space<vmem>>, vector<1x1x1x8x128xf32>
    %144 = vector.shape_cast %143 : vector<1x1x1x8x128xf32> to vector<8x128xf32>
    %145 = vector.shape_cast %142 : vector<8x128xf32> to vector<1x1x1x8x128xf32>
    tpu.vector_store %arg6[%c0_62, %c0_63, %c0_64, %c0_65, %c0_66], %145 {strides = array<i32>} : memref<1x1x4x8x128xf32, #tpu.memory_space<vmem>>, vector<1x1x1x8x128xf32>,
    %c0_67 = arith.constant 0 : index
    %c0_68 = arith.constant 0 : index
    %c0_69 = arith.constant 0 : index
    %c0_70 = arith.constant 0 : index
    %c0_71 = arith.constant 0 : index
    %146 = vector.load %arg7[%c0_67, %c0_68, %c0_69, %c0_70, %c0_71] : memref<1x1x4x8x128xf32, #tpu.memory_space<vmem>>, vector<1x1x1x8x128xf32>
    %147 = vector.shape_cast %146 : vector<1x1x1x8x128xf32> to vector<8x128xf32>
    %148 = arith.addf %147, %103 : vector<8x128xf32>
    %c0_72 = arith.constant 0 : index
    %c0_73 = arith.constant 0 : index
    %c0_74 = arith.constant 0 : index
    %c0_75 = arith.constant 0 : index
    %c0_76 = arith.constant 0 : index
    %149 = vector.load %arg7[%c0_72, %c0_73, %c0_74, %c0_75, %c0_76] : memref<1x1x4x8x128xf32, #tpu.memory_space<vmem>>, vector<1x1x1x8x128xf32>
    %150 = vector.shape_cast %149 : vector<1x1x1x8x128xf32> to vector<8x128xf32>
    %151 = vector.shape_cast %148 : vector<8x128xf32> to vector<1x1x1x8x128xf32>
    tpu.vector_store %arg7[%c0_72, %c0_73, %c0_74, %c0_75, %c0_76], %151 {strides = array<i32>} : memref<1x1x4x8x128xf32, #tpu.memory_space<vmem>>, vector<1x1x1x8x128xf32>,
    %c0_77 = arith.constant 0 : index
    %c0_78 = arith.constant 0 : index
    %c1_79 = arith.constant 1 : index
    %c0_80 = arith.constant 0 : index
    %c0_81 = arith.constant 0 : index
    %152 = vector.load %arg5[%c0_77, %c0_78, %c1_79, %c0_80, %c0_81] : memref<1x1x4x8x128xf32, #tpu.memory_space<vmem>>, vector<1x1x1x8x128xf32>
    %153 = vector.shape_cast %152 : vector<1x1x1x8x128xf32> to vector<8x128xf32>
    %154 = arith.addf %153, %107 : vector<8x128xf32>
    %c0_82 = arith.constant 0 : index
    %c0_83 = arith.constant 0 : index
    %c1_84 = arith.constant 1 : index
    %c0_85 = arith.constant 0 : index
    %c0_86 = arith.constant 0 : index
    %155 = vector.load %arg5[%c0_82, %c0_83, %c1_84, %c0_85, %c0_86] : memref<1x1x4x8x128xf32, #tpu.memory_space<vmem>>, vector<1x1x1x8x128xf32>
    %156 = vector.shape_cast %155 : vector<1x1x1x8x128xf32> to vector<8x128xf32>
    %157 = vector.shape_cast %154 : vector<8x128xf32> to vector<1x1x1x8x128xf32>
    tpu.vector_store %arg5[%c0_82, %c0_83, %c1_84, %c0_85, %c0_86], %157 {strides = array<i32>} : memref<1x1x4x8x128xf32, #tpu.memory_space<vmem>>, vector<1x1x1x8x128xf32>,
    %c0_87 = arith.constant 0 : index
    %c0_88 = arith.constant 0 : index
    %c1_89 = arith.constant 1 : index
    %c0_90 = arith.constant 0 : index
    %c0_91 = arith.constant 0 : index
    %158 = vector.load %arg6[%c0_87, %c0_88, %c1_89, %c0_90, %c0_91] : memref<1x1x4x8x128xf32, #tpu.memory_space<vmem>>, vector<1x1x1x8x128xf32>
    %159 = vector.shape_cast %158 : vector<1x1x1x8x128xf32> to vector<8x128xf32>
    %160 = arith.addf %159, %110 : vector<8x128xf32>
    %c0_92 = arith.constant 0 : index
    %c0_93 = arith.constant 0 : index
    %c1_94 = arith.constant 1 : index
    %c0_95 = arith.constant 0 : index
    %c0_96 = arith.constant 0 : index
    %161 = vector.load %arg6[%c0_92, %c0_93, %c1_94, %c0_95, %c0_96] : memref<1x1x4x8x128xf32, #tpu.memory_space<vmem>>, vector<1x1x1x8x128xf32>
    %162 = vector.shape_cast %161 : vector<1x1x1x8x128xf32> to vector<8x128xf32>
    %163 = vector.shape_cast %160 : vector<8x128xf32> to vector<1x1x1x8x128xf32>
    tpu.vector_store %arg6[%c0_92, %c0_93, %c1_94, %c0_95, %c0_96], %163 {strides = array<i32>} : memref<1x1x4x8x128xf32, #tpu.memory_space<vmem>>, vector<1x1x1x8x128xf32>,
    %c0_97 = arith.constant 0 : index
    %c0_98 = arith.constant 0 : index
    %c1_99 = arith.constant 1 : index
    %c0_100 = arith.constant 0 : index
    %c0_101 = arith.constant 0 : index
    %164 = vector.load %arg7[%c0_97, %c0_98, %c1_99, %c0_100, %c0_101] : memref<1x1x4x8x128xf32, #tpu.memory_space<vmem>>, vector<1x1x1x8x128xf32>
    %165 = vector.shape_cast %164 : vector<1x1x1x8x128xf32> to vector<8x128xf32>
    %166 = arith.addf %165, %113 : vector<8x128xf32>
    %c0_102 = arith.constant 0 : index
    %c0_103 = arith.constant 0 : index
    %c1_104 = arith.constant 1 : index
    %c0_105 = arith.constant 0 : index
    %c0_106 = arith.constant 0 : index
    %167 = vector.load %arg7[%c0_102, %c0_103, %c1_104, %c0_105, %c0_106] : memref<1x1x4x8x128xf32, #tpu.memory_space<vmem>>, vector<1x1x1x8x128xf32>
    %168 = vector.shape_cast %167 : vector<1x1x1x8x128xf32> to vector<8x128xf32>
    %169 = vector.shape_cast %166 : vector<8x128xf32> to vector<1x1x1x8x128xf32>
    tpu.vector_store %arg7[%c0_102, %c0_103, %c1_104, %c0_105, %c0_106], %169 {strides = array<i32>} : memref<1x1x4x8x128xf32, #tpu.memory_space<vmem>>, vector<1x1x1x8x128xf32>,
    %c0_107 = arith.constant 0 : index
    %c0_108 = arith.constant 0 : index
    %c2_109 = arith.constant 2 : index
    %c0_110 = arith.constant 0 : index
    %c0_111 = arith.constant 0 : index
    %170 = vector.load %arg5[%c0_107, %c0_108, %c2_109, %c0_110, %c0_111] : memref<1x1x4x8x128xf32, #tpu.memory_space<vmem>>, vector<1x1x1x8x128xf32>
    %171 = vector.shape_cast %170 : vector<1x1x1x8x128xf32> to vector<8x128xf32>
    %172 = arith.addf %171, %117 : vector<8x128xf32>
    %c0_112 = arith.constant 0 : index
    %c0_113 = arith.constant 0 : index
    %c2_114 = arith.constant 2 : index
    %c0_115 = arith.constant 0 : index
    %c0_116 = arith.constant 0 : index
    %173 = vector.load %arg5[%c0_112, %c0_113, %c2_114, %c0_115, %c0_116] : memref<1x1x4x8x128xf32, #tpu.memory_space<vmem>>, vector<1x1x1x8x128xf32>
    %174 = vector.shape_cast %173 : vector<1x1x1x8x128xf32> to vector<8x128xf32>
    %175 = vector.shape_cast %172 : vector<8x128xf32> to vector<1x1x1x8x128xf32>
    tpu.vector_store %arg5[%c0_112, %c0_113, %c2_114, %c0_115, %c0_116], %175 {strides = array<i32>} : memref<1x1x4x8x128xf32, #tpu.memory_space<vmem>>, vector<1x1x1x8x128xf32>,
    %c0_117 = arith.constant 0 : index
    %c0_118 = arith.constant 0 : index
    %c2_119 = arith.constant 2 : index
    %c0_120 = arith.constant 0 : index
    %c0_121 = arith.constant 0 : index
    %176 = vector.load %arg6[%c0_117, %c0_118, %c2_119, %c0_120, %c0_121] : memref<1x1x4x8x128xf32, #tpu.memory_space<vmem>>, vector<1x1x1x8x128xf32>
    %177 = vector.shape_cast %176 : vector<1x1x1x8x128xf32> to vector<8x128xf32>
    %178 = arith.addf %177, %120 : vector<8x128xf32>
    %c0_122 = arith.constant 0 : index
    %c0_123 = arith.constant 0 : index
    %c2_124 = arith.constant 2 : index
    %c0_125 = arith.constant 0 : index
    %c0_126 = arith.constant 0 : index
    %179 = vector.load %arg6[%c0_122, %c0_123, %c2_124, %c0_125, %c0_126] : memref<1x1x4x8x128xf32, #tpu.memory_space<vmem>>, vector<1x1x1x8x128xf32>
    %180 = vector.shape_cast %179 : vector<1x1x1x8x128xf32> to vector<8x128xf32>
    %181 = vector.shape_cast %178 : vector<8x128xf32> to vector<1x1x1x8x128xf32>
    tpu.vector_store %arg6[%c0_122, %c0_123, %c2_124, %c0_125, %c0_126], %181 {strides = array<i32>} : memref<1x1x4x8x128xf32, #tpu.memory_space<vmem>>, vector<1x1x1x8x128xf32>,
    %c0_127 = arith.constant 0 : index
    %c0_128 = arith.constant 0 : index
    %c2_129 = arith.constant 2 : index
    %c0_130 = arith.constant 0 : index
    %c0_131 = arith.constant 0 : index
    %182 = vector.load %arg7[%c0_127, %c0_128, %c2_129, %c0_130, %c0_131] : memref<1x1x4x8x128xf32, #tpu.memory_space<vmem>>, vector<1x1x1x8x128xf32>
    %183 = vector.shape_cast %182 : vector<1x1x1x8x128xf32> to vector<8x128xf32>
    %184 = arith.addf %183, %123 : vector<8x128xf32>
    %c0_132 = arith.constant 0 : index
    %c0_133 = arith.constant 0 : index
    %c2_134 = arith.constant 2 : index
    %c0_135 = arith.constant 0 : index
    %c0_136 = arith.constant 0 : index
    %185 = vector.load %arg7[%c0_132, %c0_133, %c2_134, %c0_135, %c0_136] : memref<1x1x4x8x128xf32, #tpu.memory_space<vmem>>, vector<1x1x1x8x128xf32>
    %186 = vector.shape_cast %185 : vector<1x1x1x8x128xf32> to vector<8x128xf32>
    %187 = vector.shape_cast %184 : vector<8x128xf32> to vector<1x1x1x8x128xf32>
    tpu.vector_store %arg7[%c0_132, %c0_133, %c2_134, %c0_135, %c0_136], %187 {strides = array<i32>} : memref<1x1x4x8x128xf32, #tpu.memory_space<vmem>>, vector<1x1x1x8x128xf32>,
    %c0_137 = arith.constant 0 : index
    %c0_138 = arith.constant 0 : index
    %c3_139 = arith.constant 3 : index
    %c0_140 = arith.constant 0 : index
    %c0_141 = arith.constant 0 : index
    %188 = vector.load %arg5[%c0_137, %c0_138, %c3_139, %c0_140, %c0_141] : memref<1x1x4x8x128xf32, #tpu.memory_space<vmem>>, vector<1x1x1x8x128xf32>
    %189 = vector.shape_cast %188 : vector<1x1x1x8x128xf32> to vector<8x128xf32>
    %190 = arith.addf %189, %127 : vector<8x128xf32>
    %c0_142 = arith.constant 0 : index
    %c0_143 = arith.constant 0 : index
    %c3_144 = arith.constant 3 : index
    %c0_145 = arith.constant 0 : index
    %c0_146 = arith.constant 0 : index
    %191 = vector.load %arg5[%c0_142, %c0_143, %c3_144, %c0_145, %c0_146] : memref<1x1x4x8x128xf32, #tpu.memory_space<vmem>>, vector<1x1x1x8x128xf32>
    %192 = vector.shape_cast %191 : vector<1x1x1x8x128xf32> to vector<8x128xf32>
    %193 = vector.shape_cast %190 : vector<8x128xf32> to vector<1x1x1x8x128xf32>
    tpu.vector_store %arg5[%c0_142, %c0_143, %c3_144, %c0_145, %c0_146], %193 {strides = array<i32>} : memref<1x1x4x8x128xf32, #tpu.memory_space<vmem>>, vector<1x1x1x8x128xf32>,
    %c0_147 = arith.constant 0 : index
    %c0_148 = arith.constant 0 : index
    %c3_149 = arith.constant 3 : index
    %c0_150 = arith.constant 0 : index
    %c0_151 = arith.constant 0 : index
    %194 = vector.load %arg6[%c0_147, %c0_148, %c3_149, %c0_150, %c0_151] : memref<1x1x4x8x128xf32, #tpu.memory_space<vmem>>, vector<1x1x1x8x128xf32>
    %195 = vector.shape_cast %194 : vector<1x1x1x8x128xf32> to vector<8x128xf32>
    %196 = arith.addf %195, %130 : vector<8x128xf32>
    %c0_152 = arith.constant 0 : index
    %c0_153 = arith.constant 0 : index
    %c3_154 = arith.constant 3 : index
    %c0_155 = arith.constant 0 : index
    %c0_156 = arith.constant 0 : index
    %197 = vector.load %arg6[%c0_152, %c0_153, %c3_154, %c0_155, %c0_156] : memref<1x1x4x8x128xf32, #tpu.memory_space<vmem>>, vector<1x1x1x8x128xf32>
    %198 = vector.shape_cast %197 : vector<1x1x1x8x128xf32> to vector<8x128xf32>
    %199 = vector.shape_cast %196 : vector<8x128xf32> to vector<1x1x1x8x128xf32>
    tpu.vector_store %arg6[%c0_152, %c0_153, %c3_154, %c0_155, %c0_156], %199 {strides = array<i32>} : memref<1x1x4x8x128xf32, #tpu.memory_space<vmem>>, vector<1x1x1x8x128xf32>,
    %c0_157 = arith.constant 0 : index
    %c0_158 = arith.constant 0 : index
    %c3_159 = arith.constant 3 : index
    %c0_160 = arith.constant 0 : index
    %c0_161 = arith.constant 0 : index
    %200 = vector.load %arg7[%c0_157, %c0_158, %c3_159, %c0_160, %c0_161] : memref<1x1x4x8x128xf32, #tpu.memory_space<vmem>>, vector<1x1x1x8x128xf32>
    %201 = vector.shape_cast %200 : vector<1x1x1x8x128xf32> to vector<8x128xf32>
    %202 = arith.addf %201, %133 : vector<8x128xf32>
    %c0_162 = arith.constant 0 : index
    %c0_163 = arith.constant 0 : index
    %c3_164 = arith.constant 3 : index
    %c0_165 = arith.constant 0 : index
    %c0_166 = arith.constant 0 : index
    %203 = vector.load %arg7[%c0_162, %c0_163, %c3_164, %c0_165, %c0_166] : memref<1x1x4x8x128xf32, #tpu.memory_space<vmem>>, vector<1x1x1x8x128xf32>
    %204 = vector.shape_cast %203 : vector<1x1x1x8x128xf32> to vector<8x128xf32>
    %205 = vector.shape_cast %202 : vector<8x128xf32> to vector<1x1x1x8x128xf32>
    tpu.vector_store %arg7[%c0_162, %c0_163, %c3_164, %c0_165, %c0_166], %205 {strides = array<i32>} : memref<1x1x4x8x128xf32, #tpu.memory_space<vmem>>, vector<1x1x1x8x128xf32>,
    return
  }
  func.func @transform_0(%arg0: i32, %arg1: i32, %arg2: i32) -> (i32, i32, i32, i32) {
    %c1_i32 = arith.constant 1 : i32
    %0 = arith.muli %arg1, %c1_i32 : i32
    %1 = arith.addi %0, %arg2 : i32
    %c0_i32 = arith.constant 0 : i32
    %c0_i32_0 = arith.constant 0 : i32
    %c0_i32_1 = arith.constant 0 : i32
    return %arg0, %c0_i32, %1, %c0_i32_0 : i32, i32, i32, i32
  }
  func.func @transform_1(%arg0: i32, %arg1: i32, %arg2: i32) -> (i32, i32, i32) {
    %c1_i32 = arith.constant 1 : i32
    %0 = arith.muli %arg1, %c1_i32 : i32
    %1 = arith.addi %0, %arg2 : i32
    %c0_i32 = arith.constant 0 : i32
    %c0_i32_0 = arith.constant 0 : i32
    return %arg0, %1, %c0_i32 : i32, i32, i32
  }
  func.func @transform_2(%arg0: i32, %arg1: i32, %arg2: i32) -> (i32, i32, i32, i32, i32) {
    %c0_i32 = arith.constant 0 : i32
    %c0_i32_0 = arith.constant 0 : i32
    %c0_i32_1 = arith.constant 0 : i32
    %c0_i32_2 = arith.constant 0 : i32
    return %arg0, %arg1, %c0_i32, %c0_i32_0, %c0_i32_1 : i32, i32, i32, i32, i32
  }
  func.func @transform_3(%arg0: i32, %arg1: i32, %arg2: i32) -> (i32, i32, i32, i32, i32) {
    %c0_i32 = arith.constant 0 : i32
    %c0_i32_0 = arith.constant 0 : i32
    %c0_i32_1 = arith.constant 0 : i32
    %c0_i32_2 = arith.constant 0 : i32
    return %arg0, %arg1, %c0_i32, %c0_i32_0, %c0_i32_1 : i32, i32, i32, i32, i32
  }
  func.func @transform_4(%arg0: i32, %arg1: i32, %arg2: i32) -> (i32, i32, i32, i32, i32) {
    %c0_i32 = arith.constant 0 : i32
    %c0_i32_0 = arith.constant 0 : i32
    %c0_i32_1 = arith.constant 0 : i32
    %c0_i32_2 = arith.constant 0 : i32
    return %arg0, %arg1, %c0_i32, %c0_i32_0, %c0_i32_1 : i32, i32, i32, i32, i32
  }
}

</mosaic_0001>

<llo_original>
// kernel: tpu_custom_call.1
$region0: #{tpu_custom_call.1}
  #allocation0 [shape = 'u32[]', space=smem, size = 0x4, offset = 0x4, fixed_abs, tag = 'smem constant byte address 0x4 - core index']
  #allocation1 [shape = 'u32[144,128]{1,0:T(1,128)}', space=vmem, size = 0x12000, scoped, tag = 'internal scratch']
  %s0 = inlined_call_operand.hbm [shape: f32[2,4,16,128], index: 0, kind: input, shape index: {}]
  %s1 = inlined_call_operand.hbm [shape: s32[2,16,128], index: 1, kind: input, shape index: {}]
  %s2 = inlined_call_operand.hbm [shape: f32[2,1,4,8,128], index: 2, kind: output, shape index: {0}]
  %s3 = inlined_call_operand.hbm [shape: f32[2,1,4,8,128], index: 3, kind: output, shape index: {1}]
  %s4 = inlined_call_operand.hbm [shape: f32[2,1,4,8,128], index: 4, kind: output, shape index: {2}]
  %5 = xla_tuple %s2, %s3, %s4
  %s6 = sld [smem:[#allocation0]]
  $region69: #{tpu_custom_call.1} parent=0
    _
  %s8 = ssub.s32 1, %s6
  %s9 = scalar_select 0, %s8, %s6
  $region1: #{tpu_custom_call.1} parent=0
    #allocation2 [shape = 'u8[65536]{0}', space=vmem, size = 0x10000, scoped, tag = 'input window, operand 0']
    #allocation3 [shape = 's32[2]{0}', space=sflag, size = 0x8, scoped, tag = 'scoped memory for tpu_custom_call.1']
    #allocation4 [shape = 's32[2]{0}', space=sflag, size = 0x8, scoped, tag = 'scoped memory for tpu_custom_call.1']
    #allocation5 [shape = 'u8[16384]{0}', space=vmem, size = 0x4000, scoped, tag = 'input window, operand 1']
    #allocation6 [shape = 's32[2]{0}', space=sflag, size = 0x8, scoped, tag = 'scoped memory for tpu_custom_call.1']
    #allocation7 [shape = 'u8[32768]{0}', space=vmem, size = 0x8000, scoped, tag = 'output window, operand 0']
    #allocation8 [shape = 'u8[32768]{0}', space=vmem, size = 0x8000, scoped, tag = 'output window, operand 1']
    #allocation9 [shape = 's32[2]{0}', space=sflag, size = 0x8, scoped, tag = 'scoped memory for tpu_custom_call.1']
    #allocation10 [shape = 'u8[32768]{0}', space=vmem, size = 0x8000, scoped, tag = 'output window, operand 2']
    %10 = vsyncpa [#allocation3], 0
    %s11 = scalar_lea.sflag [#allocation3], 1
    %12 = vsyncpa %s11, 0
    %13 = vsyncpa [#allocation6], 0
    %s14 = scalar_lea.sflag [#allocation6], 1
    %15 = vsyncpa %s14, 0
    %16 = vsyncpa [#allocation4], 0
    %s17 = scalar_lea.sflag [#allocation4], 1
    %18 = vsyncpa %s17, 0
    %19 = vsyncpa [#allocation9], 0
    %s20 = scalar_lea.sflag [#allocation9], 1
    %21 = vsyncpa %s20, 0
    loop: start=0, step=1, limit=4
    $region2: #{tpu_custom_call.1} parent=1 // loop_pre_header
      _
    $region3: #{tpu_custom_call.1} parent=1 // loop_header
      %s23 = sphi 0, %s27
      %p24 = scmp.ge.s32.totalorder %s23, 4
      %s30 = sphi 0, %s49
      %s31 = sphi 0, %s45
      %s32 = sphi 0, %s41
      %s33 = sphi 0, %s30
      %s34 = sphi 0, %s31
      %s35 = sphi 0, %s32
      %s36 = sphi 0, %s33
      %s37 = sphi 0, %s34
      %s38 = sphi 0, %s35
      %s56 = sphi 0, %s58
      %s59 = sphi 0, %s56
      %s60 = sphi 0, %s59
      %s76 = sphi 0, %s60
      %s86 = sphi 0, %s88
      %s89 = sphi 0, %s86
      %s90 = sphi 0, %s89
      %s106 = sphi 0, %s90
      %s114 = sphi 0, %s116
      %s117 = sphi 0, %s114
      %s118 = sphi 0, %s117
      %s134 = sphi 0, %s118
      %s142 = sphi 0, %s144
      %s145 = sphi 0, %s142
      %s146 = sphi 0, %s145
      %s162 = sphi 0, %s146
      %s170 = sphi 0, %s172
      %s173 = sphi 0, %s170
      %s174 = sphi 0, %s173
      %s190 = sphi 0, %s174
    $region4: #{tpu_custom_call.1} parent=1 // loop_header_branch
      %26 = sbr.rel (%p24) target = $region8
    $region5: #{tpu_custom_call.1} parent=1 // loop_body
      %s28 = ssub.s32 %s23, 1
      %s29 = ssub.s32 %s23, 2
      %s39 = sadd.s32 1, %s32
      %p40 = scmp.ge.s32.totalorder %s39, 1
      %s41 = scalar_select %p40, 0, %s39
      %s42 = sadd.s32 1, %s31
      %s43 = scalar_select %p40, %s42, %s31
      %p44 = scmp.ge.s32.totalorder %s43, 1
      %s45 = scalar_select %p44, 0, %s43
      %s46 = sadd.s32 1, %s30
      %s47 = scalar_select %p44, %s46, %s30
      %p48 = scmp.ge.s32.totalorder %s47, 2
      %s49 = scalar_select %p48, 0, %s47
      %s50 = sadd.s32 %s31, %s32
      %s51 = sadd.s32 %s45, %s41
      %s52 = ssub.s32 %s30, %s49
      %s53 = ssub.s32 %s50, %s51
      %s54 = sor.u32 %s52, %s53
      %p55 = scmp.eq.s32.totalorder %s54, 0
      %s57 = sadd.s32 %s56, 1
      %s58 = scalar_select %p55, %s56, %s57
      %p61 = pneg %p55
      %p62 = scmp.eq.s32.totalorder %s23, 1
      %p63 = por %p61, %p62
      %p64 = scmp.ne.s32.totalorder %s56, %s59
      %p65 = scmp.eq.s32.totalorder %s23, 0
      %p66 = por %p64, %p65
      %p67 = scmp.ne.s32.totalorder %s56, %s59
      %p68 = scmp.eq.s32.totalorder %s28, 1
      %p69 = por %p67, %p68
      %p70 = scmp.ne.s32.totalorder %s59, %s60
      %p71 = scmp.eq.s32.totalorder %s28, 0
      %p72 = por %p70, %p71
      %p73 = scmp.ne.s32.totalorder %s59, %s60
      %p74 = scmp.eq.s32.totalorder %s29, 1
      %p75 = por %p73, %p74
      %p77 = scmp.ne.s32.totalorder %s60, %s76
      %p78 = scmp.eq.s32.totalorder %s29, 0
      %p79 = por %p77, %p78
      %s80 = sadd.s32 %s31, %s32
      %s81 = sadd.s32 %s45, %s41
      %s82 = ssub.s32 %s30, %s49
      %s83 = ssub.s32 %s80, %s81
      %s84 = sor.u32 %s82, %s83
      %p85 = scmp.eq.s32.totalorder %s84, 0
      %s87 = sadd.s32 %s86, 1
      %s88 = scalar_select %p85, %s86, %s87
      %p91 = pneg %p85
      %p92 = scmp.eq.s32.totalorder %s23, 1
      %p93 = por %p91, %p92
      %p94 = scmp.ne.s32.totalorder %s86, %s89
      %p95 = scmp.eq.s32.totalorder %s23, 0
      %p96 = por %p94, %p95
      %p97 = scmp.ne.s32.totalorder %s86, %s89
      %p98 = scmp.eq.s32.totalorder %s28, 1
      %p99 = por %p97, %p98
      %p100 = scmp.ne.s32.totalorder %s89, %s90
      %p101 = scmp.eq.s32.totalorder %s28, 0
      %p102 = por %p100, %p101
      %p103 = scmp.ne.s32.totalorder %s89, %s90
      %p104 = scmp.eq.s32.totalorder %s29, 1
      %p105 = por %p103, %p104
      %p107 = scmp.ne.s32.totalorder %s90, %s106
      %p108 = scmp.eq.s32.totalorder %s29, 0
      %p109 = por %p107, %p108
      %s110 = ssub.s32 %s30, %s49
      %s111 = ssub.s32 %s31, %s45
      %s112 = sor.u32 %s110, %s111
      %p113 = scmp.eq.s32.totalorder %s112, 0
      %s115 = sadd.s32 %s114, 1
      %s116 = scalar_select %p113, %s114, %s115
      %p119 = pneg %p113
      %p120 = scmp.eq.s32.totalorder %s23, 1
      %p121 = por %p119, %p120
      %p122 = scmp.ne.s32.totalorder %s114, %s117
      %p123 = scmp.eq.s32.totalorder %s23, 0
      %p124 = por %p122, %p123
      %p125 = scmp.ne.s32.totalorder %s114, %s117
      %p126 = scmp.eq.s32.totalorder %s28, 1
      %p127 = por %p125, %p126
      %p128 = scmp.ne.s32.totalorder %s117, %s118
      %p129 = scmp.eq.s32.totalorder %s28, 0
      %p130 = por %p128, %p129
      %p131 = scmp.ne.s32.totalorder %s117, %s118
      %p132 = scmp.eq.s32.totalorder %s29, 1
      %p133 = por %p131, %p132
      %p135 = scmp.ne.s32.totalorder %s118, %s134
      %p136 = scmp.eq.s32.totalorder %s29, 0
      %p137 = por %p135, %p136
      %s138 = ssub.s32 %s30, %s49
      %s139 = ssub.s32 %s31, %s45
      %s140 = sor.u32 %s138, %s139
      %p141 = scmp.eq.s32.totalorder %s140, 0
      %s143 = sadd.s32 %s142, 1
      %s144 = scalar_select %p141, %s142, %s143
      %p147 = pneg %p141
      %p148 = scmp.eq.s32.totalorder %s23, 1
      %p149 = por %p147, %p148
      %p150 = scmp.ne.s32.totalorder %s142, %s145
      %p151 = scmp.eq.s32.totalorder %s23, 0
      %p152 = por %p150, %p151
      %p153 = scmp.ne.s32.totalorder %s142, %s145
      %p154 = scmp.eq.s32.totalorder %s28, 1
      %p155 = por %p153, %p154
      %p156 = scmp.ne.s32.totalorder %s145, %s146
      %p157 = scmp.eq.s32.totalorder %s28, 0
      %p158 = por %p156, %p157
      %p159 = scmp.ne.s32.totalorder %s145, %s146
      %p160 = scmp.eq.s32.totalorder %s29, 1
      %p161 = por %p159, %p160
      %p163 = scmp.ne.s32.totalorder %s146, %s162
      %p164 = scmp.eq.s32.totalorder %s29, 0
      %p165 = por %p163, %p164
      %s166 = ssub.s32 %s30, %s49
      %s167 = ssub.s32 %s31, %s45
      %s168 = sor.u32 %s166, %s167
      %p169 = scmp.eq.s32.totalorder %s168, 0
      %s171 = sadd.s32 %s170, 1
      %s172 = scalar_select %p169, %s170, %s171
      %p175 = pneg %p169
      %p176 = scmp.eq.s32.totalorder %s23, 1
      %p177 = por %p175, %p176
      %p178 = scmp.ne.s32.totalorder %s170, %s173
      %p179 = scmp.eq.s32.totalorder %s23, 0
      %p180 = por %p178, %p179
      %p181 = scmp.ne.s32.totalorder %s170, %s173
      %p182 = scmp.eq.s32.totalorder %s28, 1
      %p183 = por %p181, %p182
      %p184 = scmp.ne.s32.totalorder %s173, %s174
      %p185 = scmp.eq.s32.totalorder %s28, 0
      %p186 = por %p184, %p185
      %p187 = scmp.ne.s32.totalorder %s173, %s174
      %p188 = scmp.eq.s32.totalorder %s29, 1
      %p189 = por %p187, %p188
      %p191 = scmp.ne.s32.totalorder %s174, %s190
      %p192 = scmp.eq.s32.totalorder %s29, 0
      %p193 = por %p191, %p192
      %p194 = scmp.le.s32.totalorder 1, %s23
      %p195 = scmp.lt.s32.totalorder %s23, 3
      %p196 = pnand %p194, %p195
      %p197 = pneg %p196
      // Predicated region
      $region9: #{tpu_custom_call.1} parent=5 // pred_check
        _
      $region10: #{tpu_custom_call.1} parent=5 // pred_check_branch
        %199 = sbr.rel (%p196) target = $region12
      $region11: #{tpu_custom_call.1} parent=5 // pred_region
        %s200 = ssub.s32 %s23, 1
      $region12: #{tpu_custom_call.1} parent=5 // pred_fallthru
        _
      %p201 = scmp.lt.s32.totalorder %s23, 2
      // Predicated region
      $region13: #{tpu_custom_call.1} parent=5 // pred_check
        %p202 = pneg %p201
      $region14: #{tpu_custom_call.1} parent=5 // pred_check_branch
        %204 = sbr.rel (%p202) target = $region16
      $region15: #{tpu_custom_call.1} parent=5 // pred_region
        // Predicated region
        $region17: #{tpu_custom_call.1} parent=15 // pred_check
          %p205 = pneg %p66
        $region18: #{tpu_custom_call.1} parent=15 // pred_check_branch
          %207 = sbr.rel (%p205) target = $region20
        $region19: #{tpu_custom_call.1} parent=15 // pred_region
          %s208 = sand.u32 %s56, 1
          %s209 = scalar_lea.sflag [#allocation3], %s208
          %s210 = sand.u32 %s56, 1
          %s211 = smul.addr %s210, 64
          %s212 = scalar_lea.vmem [#allocation2], %s211
          %s213 = sadd.s32 %s31, %s32
          %s214 = smul.u32 2, %s213
          %s216 = ssub.s32 1024, 1024
          %217 = vsyncadd %s209, %s216
          %s218 = smul.addr %s30, 8
          %s219 = sadd.s32 %s214, %s218
          %s220 = smul.addr %s219, 128
          %s221 = scalar_lea.hbm %s0, %s220
          %s222 = sshll.u32 %s212, 4
          %s223 = int_to_ptr.vmem [resolvable:$true] %s222
          %228 = dma.hbm_to_vmem [thread:$0]  %s221, 1024, %s223, %s209, 128, 128, 8
        $region20: #{tpu_custom_call.1} parent=15 // pred_fallthru
          _
        // Predicated region
        $region21: #{tpu_custom_call.1} parent=15 // pred_check
          %p229 = pneg %p96
        $region22: #{tpu_custom_call.1} parent=15 // pred_check_branch
          %231 = sbr.rel (%p229) target = $region24
        $region23: #{tpu_custom_call.1} parent=15 // pred_region
          %s232 = sand.u32 %s86, 1
          %s233 = scalar_lea.sflag [#allocation6], %s232
          %s234 = sand.u32 %s86, 1
          %s235 = smul.addr %s234, 16
          %s236 = scalar_lea.vmem [#allocation5], %s235
          %s237 = sadd.s32 %s31, %s32
          %s238 = smul.u32 2, %s237
          %s240 = ssub.s32 256, 256
          %241 = vsyncadd %s233, %s240
          %s242 = smul.addr %s30, 2
          %s243 = sadd.s32 %s238, %s242
          %s244 = smul.addr %s243, 128
          %s245 = scalar_lea.hbm %s1, %s244
          %s246 = sshll.u32 %s236, 4
          %s247 = int_to_ptr.vmem [resolvable:$true] %s246
          %252 = dma.hbm_to_vmem [thread:$0]  %s245, 256, %s247, %s233, 128, 128, 8
        $region24: #{tpu_custom_call.1} parent=15 // pred_fallthru
          _
      $region16: #{tpu_custom_call.1} parent=5 // pred_fallthru
        _
      %p253 = scmp.le.s32.totalorder 1, %s23
      %p254 = scmp.lt.s32.totalorder %s23, 3
      %p255 = pnand %p253, %p254
      %p256 = pneg %p255
      // Predicated region
      $region25: #{tpu_custom_call.1} parent=5 // pred_check
        _
      $region26: #{tpu_custom_call.1} parent=5 // pred_check_branch
        %258 = sbr.rel (%p255) target = $region28
      $region27: #{tpu_custom_call.1} parent=5 // pred_region
        %s259 = ssub.s32 %s23, 1
        %s260 = sand.u32 %s59, 1
        %s261 = scalar_lea.sflag [#allocation3], %s260
        %s262 = sand.u32 %s59, 1
        %s263 = smul.addr %s262, 64
        %s264 = scalar_lea.vmem [#allocation2], %s263
        // Predicated region
        $region29: #{tpu_custom_call.1} parent=27 // pred_check
          %p265 = pneg %p72
        $region30: #{tpu_custom_call.1} parent=27 // pred_check_branch
          %267 = sbr.rel (%p265) target = $region32
        $region31: #{tpu_custom_call.1} parent=27 // pred_region
          %268 = dma.done %s261, 1024
        $region32: #{tpu_custom_call.1} parent=27 // pred_fallthru
          _
        %s269 = sand.u32 %s89, 1
        %s270 = scalar_lea.sflag [#allocation6], %s269
        %s271 = sand.u32 %s89, 1
        %s272 = smul.addr %s271, 16
        %s273 = scalar_lea.vmem [#allocation5], %s272
        // Predicated region
        $region33: #{tpu_custom_call.1} parent=27 // pred_check
          %p274 = pneg %p102
        $region34: #{tpu_custom_call.1} parent=27 // pred_check_branch
          %276 = sbr.rel (%p274) target = $region36
        $region35: #{tpu_custom_call.1} parent=27 // pred_region
          %277 = dma.done %s270, 256
        $region36: #{tpu_custom_call.1} parent=27 // pred_fallthru
          _
        %s278 = sand.u32 %s59, 1
        %s279 = scalar_lea.sflag [#allocation3], %s278
        %s280 = sand.u32 %s59, 1
        %s281 = smul.addr %s280, 64
        %s282 = scalar_lea.vmem [#allocation2], %s281
        %p283 = pneg %p72
        %p284 = pneg %p69
        %s285 = sand.u32 %s89, 1
        %s286 = scalar_lea.sflag [#allocation6], %s285
        %s287 = sand.u32 %s89, 1
        %s288 = smul.addr %s287, 16
        %s289 = scalar_lea.vmem [#allocation5], %s288
        %p290 = pneg %p102
        %p291 = pneg %p99
        %p292 = pneg %p130
        %p293 = pneg %p127
        %s294 = sand.u32 %s117, 1
        %s295 = scalar_lea.sflag [#allocation4], %s294
        %s296 = sand.u32 %s117, 1
        %s297 = smul.addr %s296, 32
        %s298 = scalar_lea.vmem [#allocation7], %s297
        %p299 = pneg %p158
        %p300 = pneg %p155
        %s301 = sand.u32 %s28, 1
        %s302 = scalar_lea.sflag [#allocation9], %s301
        %s303 = sand.u32 %s145, 1
        %s304 = smul.addr %s303, 32
        %s305 = scalar_lea.vmem [#allocation8], %s304
        %p306 = pneg %p186
        %p307 = pneg %p183
        %s308 = sand.u32 %s28, 1
        %s309 = scalar_lea.sflag [#allocation9], %s308
        %s310 = sand.u32 %s173, 1
        %s311 = smul.addr %s310, 32
        %s312 = scalar_lea.vmem [#allocation10], %s311
        %s313 = sadd.s32 %s34, %s35
        %s314 = smul.u32 2, %s313
        %s315 = sadd.s32 %s34, %s35
        %s316 = smul.u32 2, %s315
        %p317 = scmp.eq.s32.totalorder %s35, 0
        // Predicated region
        $region37: #{tpu_custom_call.1} parent=27 // pred_check
          %p318 = pneg %p317
        $region38: #{tpu_custom_call.1} parent=27 // pred_check_branch
          %320 = sbr.rel (%p318) target = $region40
        $region39: #{tpu_custom_call.1} parent=27 // pred_region
          %321 = vst [vmem:[%s298] sm:$0xff] 0.0
          %322 = vst [vmem:[%s298 + $0x8] sm:$0xff] 0.0
          %323 = vst [vmem:[%s298 + $0x10] sm:$0xff] 0.0
          %324 = vst [vmem:[%s298 + $0x18] sm:$0xff] 0.0
          %325 = vst [vmem:[%s305] sm:$0xff] 0.0
          %326 = vst [vmem:[%s305 + $0x8] sm:$0xff] 0.0
          %327 = vst [vmem:[%s305 + $0x10] sm:$0xff] 0.0
          %328 = vst [vmem:[%s305 + $0x18] sm:$0xff] 0.0
          %329 = vst [vmem:[%s312] sm:$0xff] 0.0
          %330 = vst [vmem:[%s312 + $0x8] sm:$0xff] 0.0
          %331 = vst [vmem:[%s312 + $0x10] sm:$0xff] 0.0
          %332 = vst [vmem:[%s312 + $0x18] sm:$0xff] 0.0
        $region40: #{tpu_custom_call.1} parent=27 // pred_fallthru
          _
        %v333 = vld [vmem:[%s273] sm:$0xff]
        %v334 = vld [vmem:[%s264] sm:$0xff]
        %s335 = scalar_lea.vmem %s264, 16 [#allocation2]
        %v336 = vld [vmem:[%s335] sm:$0xff]
        %s337 = scalar_lea.vmem %s264, 32 [#allocation2]
        %v338 = vld [vmem:[%s337] sm:$0xff]
        %s339 = scalar_lea.vmem %s264, 48 [#allocation2]
        %v340 = vld [vmem:[%s339] sm:$0xff]
        %v341 = vmax.f32 %v334, %v336
        %v342 = vmax.f32 %v341, %v338
        %v343 = vmax.f32 %v342, %v340
        %v344 = vsub.f32 %v334, %v343
        %v345 = vmul.f32 %v344, 1.442695
        %v346 = vpow.pop %v345
        %v347 = vsub.f32 %v336, %v343
        %v348 = vmul.f32 %v347, 1.442695
        %v349 = vpow.pop %v348
        %v350 = vsub.f32 %v338, %v343
        %v351 = vmul.f32 %v350, 1.442695
        %v352 = vpow.pop %v351
        %v353 = vsub.f32 %v340, %v343
        %v354 = vmul.f32 %v353, 1.442695
        %v355 = vpow.pop %v354
        %v356 = vadd.f32 %v346, %v349
        %v357 = vadd.f32 %v356, %v352
        %v358 = vadd.f32 %v357, %v355
        %v359 = vrcp.pop %v358
        %v360 = vmul.f32 %v346, %v359
        %vm361 = vcmp.eq.s32.totalorder %v333, 0
        %v362 = vadd.f32 %v360, 0.0
        %v363 = vsel %vm361, 1, 0
        %v364 = vcvt.s32.f32 %v363
        %v365 = vadd.f32 %v364, 0.0
        %v366 = vsel %vm361, %v360, 0.0
        %v367 = vadd.f32 %v366, 0.0
        %v368 = vmul.f32 %v349, %v359
        %vm369 = vcmp.eq.s32.totalorder %v333, 1
        %v370 = vadd.f32 %v368, 0.0
        %v371 = vsel %vm369, 1, 0
        %v372 = vcvt.s32.f32 %v371
        %v373 = vadd.f32 %v372, 0.0
        %v374 = vsel %vm369, %v368, 0.0
        %v375 = vadd.f32 %v374, 0.0
        %v376 = vmul.f32 %v352, %v359
        %vm377 = vcmp.eq.s32.totalorder %v333, 2
        %v378 = vadd.f32 %v376, 0.0
        %v379 = vsel %vm377, 1, 0
        %v380 = vcvt.s32.f32 %v379
        %v381 = vadd.f32 %v380, 0.0
        %v382 = vsel %vm377, %v376, 0.0
        %v383 = vadd.f32 %v382, 0.0
        %v384 = vmul.f32 %v355, %v359
        %vm385 = vcmp.eq.s32.totalorder %v333, 3
        %v386 = vadd.f32 %v384, 0.0
        %v387 = vsel %vm385, 1, 0
        %v388 = vcvt.s32.f32 %v387
        %v389 = vadd.f32 %v388, 0.0
        %v390 = vsel %vm385, %v384, 0.0
        %v391 = vadd.f32 %v390, 0.0
        %v392 = vld [vmem:[%s273 + $0x8] sm:$0xff]
        %v393 = vld [vmem:[%s264 + $0x8] sm:$0xff]
        %v394 = vld [vmem:[%s335 + $0x8] sm:$0xff]
        %v395 = vld [vmem:[%s337 + $0x8] sm:$0xff]
        %v396 = vld [vmem:[%s339 + $0x8] sm:$0xff]
        %v397 = vmax.f32 %v393, %v394
        %v398 = vmax.f32 %v397, %v395
        %v399 = vmax.f32 %v398, %v396
        %v400 = vsub.f32 %v393, %v399
        %v401 = vmul.f32 %v400, 1.442695
        %v402 = vpow.pop %v401
        %v403 = vsub.f32 %v394, %v399
        %v404 = vmul.f32 %v403, 1.442695
        %v405 = vpow.pop %v404
        %v406 = vsub.f32 %v395, %v399
        %v407 = vmul.f32 %v406, 1.442695
        %v408 = vpow.pop %v407
        %v409 = vsub.f32 %v396, %v399
        %v410 = vmul.f32 %v409, 1.442695
        %v411 = vpow.pop %v410
        %v412 = vadd.f32 %v402, %v405
        %v413 = vadd.f32 %v412, %v408
        %v414 = vadd.f32 %v413, %v411
        %v415 = vrcp.pop %v414
        %v416 = vmul.f32 %v402, %v415
        %vm417 = vcmp.eq.s32.totalorder %v392, 0
        %v418 = vadd.f32 %v362, %v416
        %v419 = vsel %vm417, 1, 0
        %v420 = vcvt.s32.f32 %v419
        %v421 = vadd.f32 %v365, %v420
        %v422 = vsel %vm417, %v416, 0.0
        %v423 = vadd.f32 %v367, %v422
        %v424 = vmul.f32 %v405, %v415
        %vm425 = vcmp.eq.s32.totalorder %v392, 1
        %v426 = vadd.f32 %v370, %v424
        %v427 = vsel %vm425, 1, 0
        %v428 = vcvt.s32.f32 %v427
        %v429 = vadd.f32 %v373, %v428
        %v430 = vsel %vm425, %v424, 0.0
        %v431 = vadd.f32 %v375, %v430
        %v432 = vmul.f32 %v408, %v415
        %vm433 = vcmp.eq.s32.totalorder %v392, 2
        %v434 = vadd.f32 %v378, %v432
        %v435 = vsel %vm433, 1, 0
        %v436 = vcvt.s32.f32 %v435
        %v437 = vadd.f32 %v381, %v436
        %v438 = vsel %vm433, %v432, 0.0
        %v439 = vadd.f32 %v383, %v438
        %v440 = vmul.f32 %v411, %v415
        %vm441 = vcmp.eq.s32.totalorder %v392, 3
        %v442 = vadd.f32 %v386, %v440
        %v443 = vsel %vm441, 1, 0
        %v444 = vcvt.s32.f32 %v443
        %v445 = vadd.f32 %v389, %v444
        %v446 = vsel %vm441, %v440, 0.0
        %v447 = vadd.f32 %v391, %v446
        %v448 = vld [vmem:[%s298] sm:$0xff]
        %v449 = vadd.f32 %v448, %v418
        %450 = vst [vmem:[%s298] sm:$0xff] %v449
        %v451 = vld [vmem:[%s305] sm:$0xff]
        %v452 = vadd.f32 %v451, %v421
        %453 = vst [vmem:[%s305] sm:$0xff] %v452
        %v454 = vld [vmem:[%s312] sm:$0xff]
        %v455 = vadd.f32 %v454, %v423
        %456 = vst [vmem:[%s312] sm:$0xff] %v455
        %s457 = scalar_lea.vmem %s298, 8 [#allocation7]
        %v458 = vld [vmem:[%s457] sm:$0xff]
        %v459 = vadd.f32 %v458, %v426
        %460 = vst [vmem:[%s457] sm:$0xff] %v459
        %s461 = scalar_lea.vmem %s305, 8 [#allocation8]
        %v462 = vld [vmem:[%s461] sm:$0xff]
        %v463 = vadd.f32 %v462, %v429
        %464 = vst [vmem:[%s461] sm:$0xff] %v463
        %s465 = scalar_lea.vmem %s312, 8 [#allocation10]
        %v466 = vld [vmem:[%s465] sm:$0xff]
        %v467 = vadd.f32 %v466, %v431
        %468 = vst [vmem:[%s465] sm:$0xff] %v467
        %s469 = scalar_lea.vmem %s298, 16 [#allocation7]
        %v470 = vld [vmem:[%s469] sm:$0xff]
        %v471 = vadd.f32 %v470, %v434
        %472 = vst [vmem:[%s469] sm:$0xff] %v471
        %s473 = scalar_lea.vmem %s305, 16 [#allocation8]
        %v474 = vld [vmem:[%s473] sm:$0xff]
        %v475 = vadd.f32 %v474, %v437
        %476 = vst [vmem:[%s473] sm:$0xff] %v475
        %s477 = scalar_lea.vmem %s312, 16 [#allocation10]
        %v478 = vld [vmem:[%s477] sm:$0xff]
        %v479 = vadd.f32 %v478, %v439
        %480 = vst [vmem:[%s477] sm:$0xff] %v479
        %s481 = scalar_lea.vmem %s298, 24 [#allocation7]
        %v482 = vld [vmem:[%s481] sm:$0xff]
        %v483 = vadd.f32 %v482, %v442
        %484 = vst [vmem:[%s481] sm:$0xff] %v483
        %s485 = scalar_lea.vmem %s305, 24 [#allocation8]
        %v486 = vld [vmem:[%s485] sm:$0xff]
        %v487 = vadd.f32 %v486, %v445
        %488 = vst [vmem:[%s485] sm:$0xff] %v487
        %s489 = scalar_lea.vmem %s312, 24 [#allocation10]
        %v490 = vld [vmem:[%s489] sm:$0xff]
        %v491 = vadd.f32 %v490, %v447
        %492 = vst [vmem:[%s489] sm:$0xff] %v491
        %s493 = sand.u32 %s117, 1
        %s494 = scalar_lea.sflag [#allocation4], %s493
        %s495 = sand.u32 %s117, 1
        %s496 = smul.addr %s495, 32
        %s497 = scalar_lea.vmem [#allocation7], %s496
        %s498 = sand.u32 %s28, 1
        %s499 = scalar_lea.sflag [#allocation9], %s498
        %s500 = sand.u32 %s145, 1
        %s501 = smul.addr %s500, 32
        %s502 = scalar_lea.vmem [#allocation8], %s501
        %s503 = sand.u32 %s28, 1
        %s504 = scalar_lea.sflag [#allocation9], %s503
        %s505 = sand.u32 %s173, 1
        %s506 = smul.addr %s505, 32
        %s507 = scalar_lea.vmem [#allocation10], %s506
        // Predicated region
        $region41: #{tpu_custom_call.1} parent=27 // pred_check
          %p508 = pneg %p127
        $region42: #{tpu_custom_call.1} parent=27 // pred_check_branch
          %510 = sbr.rel (%p508) target = $region44
        $region43: #{tpu_custom_call.1} parent=27 // pred_region
          %s512 = ssub.s32 512, 512
          %513 = vsyncadd %s494, %s512
          %s514 = smul.addr %s34, 4
          %s515 = smul.addr %s33, 4
          %s516 = sadd.s32 %s514, %s515
          %s517 = smul.addr %s516, 128
          %s518 = scalar_lea.hbm %s2, %s517
          %s519 = sshll.u32 %s497, 4
          %s520 = int_to_ptr.vmem [resolvable:$true] %s519
          %525 = dma.vmem_to_hbm [thread:$0]  %s520, 512, %s518, %s494, 128, 128, 8
        $region44: #{tpu_custom_call.1} parent=27 // pred_fallthru
          _
        // Predicated region
        $region45: #{tpu_custom_call.1} parent=27 // pred_check
          %p526 = pneg %p155
        $region46: #{tpu_custom_call.1} parent=27 // pred_check_branch
          %528 = sbr.rel (%p526) target = $region48
        $region47: #{tpu_custom_call.1} parent=27 // pred_region
          %s530 = ssub.s32 512, 512
          %531 = vsyncadd %s499, %s530
          %s532 = smul.addr %s34, 4
          %s533 = smul.addr %s33, 4
          %s534 = sadd.s32 %s532, %s533
          %s535 = smul.addr %s534, 128
          %s536 = scalar_lea.hbm %s3, %s535
          %s537 = sshll.u32 %s502, 4
          %s538 = int_to_ptr.vmem [resolvable:$true] %s537
          %543 = dma.vmem_to_hbm [thread:$0]  %s538, 512, %s536, %s499, 128, 128, 8
        $region48: #{tpu_custom_call.1} parent=27 // pred_fallthru
          _
        // Predicated region
        $region49: #{tpu_custom_call.1} parent=27 // pred_check
          %p544 = pneg %p183
        $region50: #{tpu_custom_call.1} parent=27 // pred_check_branch
          %546 = sbr.rel (%p544) target = $region52
        $region51: #{tpu_custom_call.1} parent=27 // pred_region
          %s548 = ssub.s32 512, 512
          %549 = vsyncadd %s504, %s548
          %s550 = smul.addr %s34, 4
          %s551 = smul.addr %s33, 4
          %s552 = sadd.s32 %s550, %s551
          %s553 = smul.addr %s552, 128
          %s554 = scalar_lea.hbm %s4, %s553
          %s555 = sshll.u32 %s507, 4
          %s556 = int_to_ptr.vmem [resolvable:$true] %s555
          %561 = dma.vmem_to_hbm [thread:$0]  %s556, 512, %s554, %s504, 128, 128, 8
        $region52: #{tpu_custom_call.1} parent=27 // pred_fallthru
          _
      $region28: #{tpu_custom_call.1} parent=5 // pred_fallthru
        _
      %p562 = scmp.le.s32.totalorder 2, %s23
      // Predicated region
      $region53: #{tpu_custom_call.1} parent=5 // pred_check
        %p563 = pneg %p562
      $region54: #{tpu_custom_call.1} parent=5 // pred_check_branch
        %565 = sbr.rel (%p563) target = $region56
      $region55: #{tpu_custom_call.1} parent=5 // pred_region
        %s566 = ssub.s32 %s23, 2
        // Predicated region
        $region57: #{tpu_custom_call.1} parent=55 // pred_check
          %p567 = pneg %p133
        $region58: #{tpu_custom_call.1} parent=55 // pred_check_branch
          %569 = sbr.rel (%p567) target = $region60
        $region59: #{tpu_custom_call.1} parent=55 // pred_region
          %s570 = sand.u32 %s118, 1
          %s571 = scalar_lea.sflag [#allocation4], %s570
          %s572 = sand.u32 %s118, 1
          %s573 = smul.addr %s572, 32
          %s574 = scalar_lea.vmem [#allocation7], %s573
          %575 = dma.done %s571, 512
        $region60: #{tpu_custom_call.1} parent=55 // pred_fallthru
          _
        // Predicated region
        $region61: #{tpu_custom_call.1} parent=55 // pred_check
          %p576 = pneg %p161
        $region62: #{tpu_custom_call.1} parent=55 // pred_check_branch
          %578 = sbr.rel (%p576) target = $region64
        $region63: #{tpu_custom_call.1} parent=55 // pred_region
          %s579 = sand.u32 %s29, 1
          %s580 = scalar_lea.sflag [#allocation9], %s579
          %s581 = sand.u32 %s146, 1
          %s582 = smul.addr %s581, 32
          %s583 = scalar_lea.vmem [#allocation8], %s582
          %584 = dma.done %s580, 512
        $region64: #{tpu_custom_call.1} parent=55 // pred_fallthru
          _
        // Predicated region
        $region65: #{tpu_custom_call.1} parent=55 // pred_check
          %p585 = pneg %p189
        $region66: #{tpu_custom_call.1} parent=55 // pred_check_branch
          %587 = sbr.rel (%p585) target = $region68
        $region67: #{tpu_custom_call.1} parent=55 // pred_region
          %s588 = sand.u32 %s29, 1
          %s589 = scalar_lea.sflag [#allocation9], %s588
          %s590 = sand.u32 %s174, 1
          %s591 = smul.addr %s590, 32
          %s592 = scalar_lea.vmem [#allocation10], %s591
          %593 = dma.done %s589, 512
        $region68: #{tpu_custom_call.1} parent=55 // pred_fallthru
          _
      $region56: #{tpu_custom_call.1} parent=5 // pred_fallthru
        _
    $region6: #{tpu_custom_call.1} parent=1 // loop_footer
      %s27 = sadd.s32 1, %s23
    $region7: #{tpu_custom_call.1} parent=1 // loop_footer_branch
      %22 = sbr.rel target = $region3
    $region8: #{tpu_custom_call.1} parent=1 // loop_exit
      _
    %594 = vsyncpa [#allocation3], 1
    %s595 = scalar_lea.sflag [#allocation3], 1
    %596 = vsyncpa %s595, 1
    %597 = vsyncpa [#allocation6], 1
    %s598 = scalar_lea.sflag [#allocation6], 1
    %599 = vsyncpa %s598, 1
    %600 = vsyncpa [#allocation4], 1
    %s601 = scalar_lea.sflag [#allocation4], 1
    %602 = vsyncpa %s601, 1
    %603 = vsyncpa [#allocation9], 1
    %s604 = scalar_lea.sflag [#allocation9], 1
    %605 = vsyncpa %s604, 1

</llo_original>
